<compile_context>
chip_gen: v6e
topology: v6e:2x2x1
jax: 0.10.0
libtpu: 0.0.40
codegen_flags: <defaults>
</compile_context>

<pallas_src>
import jax
import jax.numpy as jnp
from jax.experimental import pallas as pl
from jax.experimental.pallas import tpu as pltpu


# ---------------------------------------------------------------------------
# Fused Pallas kernel: binarized 3x3/s2 conv (MXU) + pooled-BN + concat + ReLU
# ---------------------------------------------------------------------------
def _downsampler_kernel(w_ref, sc_conv_ref, sh_conv_ref, sc_pool_ref, sh_pool_ref,
                        taps_ref, pooled_ref, o_ref):
    """One (batch, output-row-tile) block per grid step.

    w_ref      : VMEM (9, cconv, cin) bf16   binarized (+/-1) weight, tap-major
    sc/sh_conv : VMEM (cconv, 1) f32         folded BN scale / shift (+ conv bias)
    sc/sh_pool : VMEM (cin, 1)   f32         folded BN scale / shift
    taps_ref   : VMEM (1, 9, cin, S) bf16    binarized, padded, per-tap input slabs
    pooled_ref : VMEM (1, cin, S) f32        2x2/s2 max-pooled raw input
    o_ref      : VMEM (1, nout, S) f32       flattened NCHW output block
    """
    cconv = w_ref.shape[1]
    s = o_ref.shape[2]

    # ---- conv branch: 9 per-tap MXU matmuls with f32 accumulation ----------
    acc = jnp.zeros((cconv, s), jnp.float32)
    for t in range(9):
        acc = acc + jnp.dot(w_ref[t], taps_ref[0, t],
                            preferred_element_type=jnp.float32)
    yconv = jnp.maximum(acc * sc_conv_ref[...] + sh_conv_ref[...], 0.0)

    # ---- pool branch: BN + ReLU on the pre-pooled planes -------------------
    ypool = jnp.maximum(pooled_ref[0] * sc_pool_ref[...] + sh_pool_ref[...], 0.0)

    # Channel-concat and a single lane-dense store of the full output block.
    o_ref[0, :, :] = jnp.concatenate([yconv, ypool], axis=0)


# ---------------------------------------------------------------------------
# Row-tile picker: lane-dense tiles that fit comfortably in VMEM on all gens
# ---------------------------------------------------------------------------
def _pick_row_tile(ho, wo, cin, nout, *, target_lanes=2048, vmem_budget=12 << 20):
    divisors = [d for d in range(1, ho + 1) if ho % d == 0]
    cands = [d for d in divisors if (d * wo) % 128 == 0]
    if not cands:
        return ho                               # tiny images: one full-array block
    # double-buffered bytes per output spatial element (taps + pooled + out)
    bytes_per_elem = 2 * (9 * cin * 2 + cin * 4 + nout * 4)
    fitting = [d for d in cands if d * wo * bytes_per_elem <= vmem_budget] or cands[:1]
    for d in fitting:
        if d * wo >= target_lanes:
            return d
    return fitting[-1]


# ---------------------------------------------------------------------------
# Wrapper: fused XLA prepass (binarize / pad / tap-split / pre-pool) + pallas_call
# ---------------------------------------------------------------------------
def downsampler_block_forward(x, conv_weight, conv_bias,
                              bn_gamma, bn_beta, bn_mean, bn_var, eps=1e-3):
    """x: (N, Cin, H, W) f32 NCHW. conv_weight: (noutput-Cin, Cin, 3, 3) PyTorch OIHW."""
    n, cin, h, w = x.shape
    cconv = conv_weight.shape[0]
    nout = cconv + cin
    assert conv_weight.shape == (cconv, cin, 3, 3)
    assert h % 2 == 0 and w % 2 == 0, "even spatial dims expected"
    # TODO(synk): odd spatial dims (PyTorch would floor) are not supported.
    ho, wo = h // 2, w // 2
    s_total = ho * wo

    # ---- XLA prepass (fuses with upstream producers) -----------------------
    # Binarize BEFORE zero-padding so the conv padding contributes 0, not -1.
    # TODO(synk): x > 0 maps exact zeros to -1; switch to sign() semantics if the
    # PyTorch binarizer keeps 0 -> 0.
    xb = jnp.where(x > 0, 1.0, -1.0).astype(jnp.bfloat16)
    xpad = jnp.pad(xb, ((0, 0), (0, 0), (1, 1), (1, 1)))
    # Per-tap stride-2 slabs (~2.25x|x| in bf16): every in-kernel access becomes a
    # unit-stride (cin, S) slice that feeds the MXU directly.
    taps = jnp.stack([xpad[:, :, ki::2, kj::2][:, :, :ho, :wo]
                      for ki in range(3) for kj in range(3)], axis=1)
    taps = taps.reshape(n, 9, cin, s_total)
    # 2x2/s2 max pool pre-reduced here (elementwise max of the 4 phases), so the
    # kernel never touches a full-resolution f32 copy of x.
    pooled = jnp.maximum(
        jnp.maximum(x[:, :, 0::2, 0::2], x[:, :, 0::2, 1::2]),
        jnp.maximum(x[:, :, 1::2, 0::2], x[:, :, 1::2, 1::2]),
    ).astype(jnp.float32).reshape(n, cin, s_total)

    # Binarized weight, tap-major, MXU-shaped: (9, cconv, cin) bf16 in VMEM.
    # TODO(synk): int8 (+/-1) operands would double MXU rate on v5e/v6e and fp8 would
    # halve bandwidth on v7x; kept bf16 so a single code path runs on every gen.
    w9 = jnp.where(conv_weight > 0, 1.0, -1.0).astype(jnp.bfloat16)
    w9 = jnp.transpose(w9, (2, 3, 0, 1)).reshape(9, cconv, cin)

    # Fold conv bias + inference BatchNorm into per-channel scale/shift.
    # TODO(synk): training-mode BatchNorm (batch statistics) is not implemented.
    scale = bn_gamma.astype(jnp.float32) * jax.lax.rsqrt(bn_var.astype(jnp.float32) + eps)
    shift = bn_beta.astype(jnp.float32) - bn_mean.astype(jnp.float32) * scale
    sc_conv = scale[:cconv].reshape(cconv, 1)
    sh_conv = (shift[:cconv] + scale[:cconv] * conv_bias.astype(jnp.float32)).reshape(cconv, 1)
    sc_pool = scale[cconv:].reshape(cin, 1)
    sh_pool = shift[cconv:].reshape(cin, 1)

    th = _pick_row_tile(ho, wo, cin, nout)
    s_blk = th * wo
    grid = (n, ho // th)

    out = pl.pallas_call(
        _downsampler_kernel,
        out_shape=jax.ShapeDtypeStruct((n, nout, s_total), jnp.float32),
        grid=grid,
        in_specs=[
            pl.BlockSpec((9, cconv, cin), lambda b, j: (0, 0, 0)),        # w9
            pl.BlockSpec((cconv, 1), lambda b, j: (0, 0)),                # sc_conv
            pl.BlockSpec((cconv, 1), lambda b, j: (0, 0)),                # sh_conv
            pl.BlockSpec((cin, 1), lambda b, j: (0, 0)),                  # sc_pool
            pl.BlockSpec((cin, 1), lambda b, j: (0, 0)),                  # sh_pool
            pl.BlockSpec((1, 9, cin, s_blk), lambda b, j: (b, 0, 0, j)),  # taps
            pl.BlockSpec((1, cin, s_blk), lambda b, j: (b, 0, j)),        # pooled
        ],
        out_specs=pl.BlockSpec((1, nout, s_blk), lambda b, j: (b, 0, j)),
        compiler_params=pltpu.CompilerParams(
            dimension_semantics=("parallel", "parallel"),
            vmem_limit_bytes=48 * 1024 * 1024,
        ),
    )(w9, sc_conv, sh_conv, sc_pool, sh_pool, taps, pooled)

    # Free (metadata-only) reshape back to NCHW.
    # TODO(synk): emit bf16 output if the next ERFNet block accepts it (halves writeback).
    return out.reshape(n, nout, ho, wo)


# ---------------------------------------------------------------------------
if __name__ == "__main__":
    key = jax.random.PRNGKey(0)
    kx, kw, kb, kg, kbt, km, kv = jax.random.split(key, 7)

    N, Cin, H, W = 2, 4, 16, 16
    Nout = 8                      # noutput; conv emits Nout - Cin = 4 channels
    Cconv = Nout - Cin
    eps = 1e-3

    x = jax.random.normal(kx, (N, Cin, H, W), dtype=jnp.float32)
    weight = jax.random.normal(kw, (Cconv, Cin, 3, 3), dtype=jnp.float32)
    bias = jax.random.normal(kb, (Cconv,), dtype=jnp.float32)
    gamma = 1.0 + 0.1 * jax.random.normal(kg, (Nout,), dtype=jnp.float32)
    beta = 0.1 * jax.random.normal(kbt, (Nout,), dtype=jnp.float32)
    mean = 0.1 * jax.random.normal(km, (Nout,), dtype=jnp.float32)
    var = jax.random.uniform(kv, (Nout,), minval=0.5, maxval=1.5, dtype=jnp.float32)

    fwd = jax.jit(downsampler_block_forward)
    out = fwd(x, weight, bias, gamma, beta, mean, var)
    out = jax.block_until_ready(out)

    # ---- XLA reference (independent of the Pallas / tap-plane path) ----
    xb_ref = jnp.where(x > 0, 1.0, -1.0)
    wb_ref = jnp.where(weight > 0, 1.0, -1.0)
    conv_ref = jax.lax.conv_general_dilated(
        xb_ref, wb_ref, window_strides=(2, 2), padding=((1, 1), (1, 1)),
        dimension_numbers=("NCHW", "OIHW", "NCHW")) + bias[None, :, None, None]
    pool_ref = jax.lax.reduce_window(
        x, -jnp.inf, jax.lax.max, (1, 1, 2, 2), (1, 1, 2, 2), "VALID")
    cat = jnp.concatenate([conv_ref, pool_ref], axis=1)
    bn = (cat - mean[None, :, None, None]) * (
        gamma[None, :, None, None] / jnp.sqrt(var[None, :, None, None] + eps)
    ) + beta[None, :, None, None]
    ref = jnp.maximum(bn, 0.0)

    assert out.shape == (N, Nout, H // 2, W // 2), out.shape
    max_err = float(jnp.max(jnp.abs(out - ref)))
    assert jnp.allclose(out, ref, atol=1e-4, rtol=1e-4), max_err

    print("KERNEL_OK")
</pallas_src>

<mosaic_0001>
module attributes {stable_mosaic.version = 11 : i64} {
  func.func @_downsampler_kernel(%arg0: i32, %arg1: i32, %arg2: memref<9x4x4xbf16, #tpu.memory_space<vmem>>, %arg3: memref<4x1xf32, #tpu.memory_space<vmem>>, %arg4: memref<4x1xf32, #tpu.memory_space<vmem>>, %arg5: memref<4x1xf32, #tpu.memory_space<vmem>>, %arg6: memref<4x1xf32, #tpu.memory_space<vmem>>, %arg7: memref<1x9x4x64xbf16, #tpu.memory_space<vmem>>, %arg8: memref<1x4x64xf32, #tpu.memory_space<vmem>>, %arg9: memref<1x8x64xf32, #tpu.memory_space<vmem>>) attributes {dimension_semantics = [#tpu.dimension_semantics<parallel>, #tpu.dimension_semantics<parallel>], iteration_bounds = array<i64: 2, 1>, scalar_prefetch = 0 : i64, scratch_operands = 0 : i64, tpu.core_type = #tpu.core_type<tc>, window_params = [{pipeline_mode = #tpu.pipeline_mode<synchronous>, transform_indices = @transform_0, window_bounds = array<i64: 9, 4, 4>}, {pipeline_mode = #tpu.pipeline_mode<synchronous>, transform_indices = @transform_1, window_bounds = array<i64: 4, 1>}, {pipeline_mode = #tpu.pipeline_mode<synchronous>, transform_indices = @transform_2, window_bounds = array<i64: 4, 1>}, {pipeline_mode = #tpu.pipeline_mode<synchronous>, transform_indices = @transform_3, window_bounds = array<i64: 4, 1>}, {pipeline_mode = #tpu.pipeline_mode<synchronous>, transform_indices = @transform_4, window_bounds = array<i64: 4, 1>}, {transform_indices = @transform_5, window_bounds = array<i64: 1, 9, 4, 64>}, {transform_indices = @transform_6, window_bounds = array<i64: 1, 4, 64>}, {transform_indices = @transform_7, window_bounds = array<i64: 1, 8, 64>}]} {
    %cst = arith.constant 0.000000e+00 : f32
    %0 = vector.broadcast %cst : f32 to vector<4x64xf32>
    %c0 = arith.constant 0 : index
    %c0_0 = arith.constant 0 : index
    %c0_1 = arith.constant 0 : index
    %1 = vector.load %arg2[%c0, %c0_0, %c0_1] : memref<9x4x4xbf16, #tpu.memory_space<vmem>>, vector<1x4x4xbf16>
    %2 = vector.shape_cast %1 : vector<1x4x4xbf16> to vector<4x4xbf16>
    %c0_2 = arith.constant 0 : index
    %c0_3 = arith.constant 0 : index
    %c0_4 = arith.constant 0 : index
    %c0_5 = arith.constant 0 : index
    %3 = vector.load %arg7[%c0_2, %c0_3, %c0_4, %c0_5] : memref<1x9x4x64xbf16, #tpu.memory_space<vmem>>, vector<1x1x4x64xbf16>
    %4 = vector.shape_cast %3 : vector<1x1x4x64xbf16> to vector<4x64xbf16>
    %cst_6 = arith.constant dense<0.000000e+00> : vector<4x64xf32>
    %5 = tpu.matmul %2, %4, %cst_6 {dimension_numbers = #tpu.dot_dimension_numbers<[1], [0], [0], [1], [0, 0, 1, 1], [], []>} : vector<4x4xbf16>, vector<4x64xbf16>, vector<4x64xf32> -> vector<4x64xf32>
    %6 = arith.addf %0, %5 : vector<4x64xf32>
    %c1 = arith.constant 1 : index
    %c0_7 = arith.constant 0 : index
    %c0_8 = arith.constant 0 : index
    %7 = vector.load %arg2[%c1, %c0_7, %c0_8] : memref<9x4x4xbf16, #tpu.memory_space<vmem>>, vector<1x4x4xbf16>
    %8 = vector.shape_cast %7 : vector<1x4x4xbf16> to vector<4x4xbf16>
    %c0_9 = arith.constant 0 : index
    %c1_10 = arith.constant 1 : index
    %c0_11 = arith.constant 0 : index
    %c0_12 = arith.constant 0 : index
    %9 = vector.load %arg7[%c0_9, %c1_10, %c0_11, %c0_12] : memref<1x9x4x64xbf16, #tpu.memory_space<vmem>>, vector<1x1x4x64xbf16>
    %10 = vector.shape_cast %9 : vector<1x1x4x64xbf16> to vector<4x64xbf16>
    %cst_13 = arith.constant dense<0.000000e+00> : vector<4x64xf32>
    %11 = tpu.matmul %8, %10, %cst_13 {dimension_numbers = #tpu.dot_dimension_numbers<[1], [0], [0], [1], [0, 0, 1, 1], [], []>} : vector<4x4xbf16>, vector<4x64xbf16>, vector<4x64xf32> -> vector<4x64xf32>
    %12 = arith.addf %6, %11 : vector<4x64xf32>
    %c2 = arith.constant 2 : index
    %c0_14 = arith.constant 0 : index
    %c0_15 = arith.constant 0 : index
    %13 = vector.load %arg2[%c2, %c0_14, %c0_15] : memref<9x4x4xbf16, #tpu.memory_space<vmem>>, vector<1x4x4xbf16>
    %14 = vector.shape_cast %13 : vector<1x4x4xbf16> to vector<4x4xbf16>
    %c0_16 = arith.constant 0 : index
    %c2_17 = arith.constant 2 : index
    %c0_18 = arith.constant 0 : index
    %c0_19 = arith.constant 0 : index
    %15 = vector.load %arg7[%c0_16, %c2_17, %c0_18, %c0_19] : memref<1x9x4x64xbf16, #tpu.memory_space<vmem>>, vector<1x1x4x64xbf16>
    %16 = vector.shape_cast %15 : vector<1x1x4x64xbf16> to vector<4x64xbf16>
    %cst_20 = arith.constant dense<0.000000e+00> : vector<4x64xf32>
    %17 = tpu.matmul %14, %16, %cst_20 {dimension_numbers = #tpu.dot_dimension_numbers<[1], [0], [0], [1], [0, 0, 1, 1], [], []>} : vector<4x4xbf16>, vector<4x64xbf16>, vector<4x64xf32> -> vector<4x64xf32>
    %18 = arith.addf %12, %17 : vector<4x64xf32>
    %c3 = arith.constant 3 : index
    %c0_21 = arith.constant 0 : index
    %c0_22 = arith.constant 0 : index
    %19 = vector.load %arg2[%c3, %c0_21, %c0_22] : memref<9x4x4xbf16, #tpu.memory_space<vmem>>, vector<1x4x4xbf16>
    %20 = vector.shape_cast %19 : vector<1x4x4xbf16> to vector<4x4xbf16>
    %c0_23 = arith.constant 0 : index
    %c3_24 = arith.constant 3 : index
    %c0_25 = arith.constant 0 : index
    %c0_26 = arith.constant 0 : index
    %21 = vector.load %arg7[%c0_23, %c3_24, %c0_25, %c0_26] : memref<1x9x4x64xbf16, #tpu.memory_space<vmem>>, vector<1x1x4x64xbf16>
    %22 = vector.shape_cast %21 : vector<1x1x4x64xbf16> to vector<4x64xbf16>
    %cst_27 = arith.constant dense<0.000000e+00> : vector<4x64xf32>
    %23 = tpu.matmul %20, %22, %cst_27 {dimension_numbers = #tpu.dot_dimension_numbers<[1], [0], [0], [1], [0, 0, 1, 1], [], []>} : vector<4x4xbf16>, vector<4x64xbf16>, vector<4x64xf32> -> vector<4x64xf32>
    %24 = arith.addf %18, %23 : vector<4x64xf32>
    %c4 = arith.constant 4 : index
    %c0_28 = arith.constant 0 : index
    %c0_29 = arith.constant 0 : index
    %25 = vector.load %arg2[%c4, %c0_28, %c0_29] : memref<9x4x4xbf16, #tpu.memory_space<vmem>>, vector<1x4x4xbf16>
    %26 = vector.shape_cast %25 : vector<1x4x4xbf16> to vector<4x4xbf16>
    %c0_30 = arith.constant 0 : index
    %c4_31 = arith.constant 4 : index
    %c0_32 = arith.constant 0 : index
    %c0_33 = arith.constant 0 : index
    %27 = vector.load %arg7[%c0_30, %c4_31, %c0_32, %c0_33] : memref<1x9x4x64xbf16, #tpu.memory_space<vmem>>, vector<1x1x4x64xbf16>
    %28 = vector.shape_cast %27 : vector<1x1x4x64xbf16> to vector<4x64xbf16>
    %cst_34 = arith.constant dense<0.000000e+00> : vector<4x64xf32>
    %29 = tpu.matmul %26, %28, %cst_34 {dimension_numbers = #tpu.dot_dimension_numbers<[1], [0], [0], [1], [0, 0, 1, 1], [], []>} : vector<4x4xbf16>, vector<4x64xbf16>, vector<4x64xf32> -> vector<4x64xf32>
    %30 = arith.addf %24, %29 : vector<4x64xf32>
    %c5 = arith.constant 5 : index
    %c0_35 = arith.constant 0 : index
    %c0_36 = arith.constant 0 : index
    %31 = vector.load %arg2[%c5, %c0_35, %c0_36] : memref<9x4x4xbf16, #tpu.memory_space<vmem>>, vector<1x4x4xbf16>
    %32 = vector.shape_cast %31 : vector<1x4x4xbf16> to vector<4x4xbf16>
    %c0_37 = arith.constant 0 : index
    %c5_38 = arith.constant 5 : index
    %c0_39 = arith.constant 0 : index
    %c0_40 = arith.constant 0 : index
    %33 = vector.load %arg7[%c0_37, %c5_38, %c0_39, %c0_40] : memref<1x9x4x64xbf16, #tpu.memory_space<vmem>>, vector<1x1x4x64xbf16>
    %34 = vector.shape_cast %33 : vector<1x1x4x64xbf16> to vector<4x64xbf16>
    %cst_41 = arith.constant dense<0.000000e+00> : vector<4x64xf32>
    %35 = tpu.matmul %32, %34, %cst_41 {dimension_numbers = #tpu.dot_dimension_numbers<[1], [0], [0], [1], [0, 0, 1, 1], [], []>} : vector<4x4xbf16>, vector<4x64xbf16>, vector<4x64xf32> -> vector<4x64xf32>
    %36 = arith.addf %30, %35 : vector<4x64xf32>
    %c6 = arith.constant 6 : index
    %c0_42 = arith.constant 0 : index
    %c0_43 = arith.constant 0 : index
    %37 = vector.load %arg2[%c6, %c0_42, %c0_43] : memref<9x4x4xbf16, #tpu.memory_space<vmem>>, vector<1x4x4xbf16>
    %38 = vector.shape_cast %37 : vector<1x4x4xbf16> to vector<4x4xbf16>
    %c0_44 = arith.constant 0 : index
    %c6_45 = arith.constant 6 : index
    %c0_46 = arith.constant 0 : index
    %c0_47 = arith.constant 0 : index
    %39 = vector.load %arg7[%c0_44, %c6_45, %c0_46, %c0_47] : memref<1x9x4x64xbf16, #tpu.memory_space<vmem>>, vector<1x1x4x64xbf16>
    %40 = vector.shape_cast %39 : vector<1x1x4x64xbf16> to vector<4x64xbf16>
    %cst_48 = arith.constant dense<0.000000e+00> : vector<4x64xf32>
    %41 = tpu.matmul %38, %40, %cst_48 {dimension_numbers = #tpu.dot_dimension_numbers<[1], [0], [0], [1], [0, 0, 1, 1], [], []>} : vector<4x4xbf16>, vector<4x64xbf16>, vector<4x64xf32> -> vector<4x64xf32>
    %42 = arith.addf %36, %41 : vector<4x64xf32>
    %c7 = arith.constant 7 : index
    %c0_49 = arith.constant 0 : index
    %c0_50 = arith.constant 0 : index
    %43 = vector.load %arg2[%c7, %c0_49, %c0_50] : memref<9x4x4xbf16, #tpu.memory_space<vmem>>, vector<1x4x4xbf16>
    %44 = vector.shape_cast %43 : vector<1x4x4xbf16> to vector<4x4xbf16>
    %c0_51 = arith.constant 0 : index
    %c7_52 = arith.constant 7 : index
    %c0_53 = arith.constant 0 : index
    %c0_54 = arith.constant 0 : index
    %45 = vector.load %arg7[%c0_51, %c7_52, %c0_53, %c0_54] : memref<1x9x4x64xbf16, #tpu.memory_space<vmem>>, vector<1x1x4x64xbf16>
    %46 = vector.shape_cast %45 : vector<1x1x4x64xbf16> to vector<4x64xbf16>
    %cst_55 = arith.constant dense<0.000000e+00> : vector<4x64xf32>
    %47 = tpu.matmul %44, %46, %cst_55 {dimension_numbers = #tpu.dot_dimension_numbers<[1], [0], [0], [1], [0, 0, 1, 1], [], []>} : vector<4x4xbf16>, vector<4x64xbf16>, vector<4x64xf32> -> vector<4x64xf32>
    %48 = arith.addf %42, %47 : vector<4x64xf32>
    %c8 = arith.constant 8 : index
    %c0_56 = arith.constant 0 : index
    %c0_57 = arith.constant 0 : index
    %49 = vector.load %arg2[%c8, %c0_56, %c0_57] : memref<9x4x4xbf16, #tpu.memory_space<vmem>>, vector<1x4x4xbf16>
    %50 = vector.shape_cast %49 : vector<1x4x4xbf16> to vector<4x4xbf16>
    %c0_58 = arith.constant 0 : index
    %c8_59 = arith.constant 8 : index
    %c0_60 = arith.constant 0 : index
    %c0_61 = arith.constant 0 : index
    %51 = vector.load %arg7[%c0_58, %c8_59, %c0_60, %c0_61] : memref<1x9x4x64xbf16, #tpu.memory_space<vmem>>, vector<1x1x4x64xbf16>
    %52 = vector.shape_cast %51 : vector<1x1x4x64xbf16> to vector<4x64xbf16>
    %cst_62 = arith.constant dense<0.000000e+00> : vector<4x64xf32>
    %53 = tpu.matmul %50, %52, %cst_62 {dimension_numbers = #tpu.dot_dimension_numbers<[1], [0], [0], [1], [0, 0, 1, 1], [], []>} : vector<4x4xbf16>, vector<4x64xbf16>, vector<4x64xf32> -> vector<4x64xf32>
    %54 = arith.addf %48, %53 : vector<4x64xf32>
    %c0_63 = arith.constant 0 : index
    %c0_64 = arith.constant 0 : index
    %55 = vector.load %arg3[%c0_63, %c0_64] : memref<4x1xf32, #tpu.memory_space<vmem>>, vector<4x1xf32>
    %56 = vector.broadcast %55 : vector<4x1xf32> to vector<4x64xf32>
    %57 = arith.mulf %54, %56 : vector<4x64xf32>
    %c0_65 = arith.constant 0 : index
    %c0_66 = arith.constant 0 : index
    %58 = vector.load %arg4[%c0_65, %c0_66] : memref<4x1xf32, #tpu.memory_space<vmem>>, vector<4x1xf32>
    %59 = vector.broadcast %58 : vector<4x1xf32> to vector<4x64xf32>
    %60 = arith.addf %57, %59 : vector<4x64xf32>
    %cst_67 = arith.constant 0.000000e+00 : f32
    %61 = vector.broadcast %cst_67 : f32 to vector<4x64xf32>
    %62 = arith.maximumf %60, %61 : vector<4x64xf32>
    %c0_68 = arith.constant 0 : index
    %c0_69 = arith.constant 0 : index
    %c0_70 = arith.constant 0 : index
    %63 = vector.load %arg8[%c0_68, %c0_69, %c0_70] : memref<1x4x64xf32, #tpu.memory_space<vmem>>, vector<1x4x64xf32>
    %64 = vector.shape_cast %63 : vector<1x4x64xf32> to vector<4x64xf32>
    %c0_71 = arith.constant 0 : index
    %c0_72 = arith.constant 0 : index
    %65 = vector.load %arg5[%c0_71, %c0_72] : memref<4x1xf32, #tpu.memory_space<vmem>>, vector<4x1xf32>
    %66 = vector.broadcast %65 : vector<4x1xf32> to vector<4x64xf32>
    %67 = arith.mulf %64, %66 : vector<4x64xf32>
    %c0_73 = arith.constant 0 : index
    %c0_74 = arith.constant 0 : index
    %68 = vector.load %arg6[%c0_73, %c0_74] : memref<4x1xf32, #tpu.memory_space<vmem>>, vector<4x1xf32>
    %69 = vector.broadcast %68 : vector<4x1xf32> to vector<4x64xf32>
    %70 = arith.addf %67, %69 : vector<4x64xf32>
    %cst_75 = arith.constant 0.000000e+00 : f32
    %71 = vector.broadcast %cst_75 : f32 to vector<4x64xf32>
    %72 = arith.maximumf %70, %71 : vector<4x64xf32>
    %73 = tpu.concatenate %62, %72 in 0 : vector<4x64xf32>, vector<4x64xf32> -> vector<8x64xf32>
    %c0_76 = arith.constant 0 : index
    %c0_77 = arith.constant 0 : index
    %c0_78 = arith.constant 0 : index
    %74 = vector.load %arg9[%c0_76, %c0_77, %c0_78] : memref<1x8x64xf32, #tpu.memory_space<vmem>>, vector<1x8x64xf32>
    %75 = vector.shape_cast %74 : vector<1x8x64xf32> to vector<8x64xf32>
    %76 = vector.shape_cast %73 : vector<8x64xf32> to vector<1x8x64xf32>
    tpu.vector_store %arg9[%c0_76, %c0_77, %c0_78], %76 {strides = array<i32>} : memref<1x8x64xf32, #tpu.memory_space<vmem>>, vector<1x8x64xf32>,
    return
  }
  func.func @transform_0(%arg0: i32, %arg1: i32) -> (i32, i32, i32) {
    %c0_i32 = arith.constant 0 : i32
    %c0_i32_0 = arith.constant 0 : i32
    %c0_i32_1 = arith.constant 0 : i32
    %c0_i32_2 = arith.constant 0 : i32
    return %c0_i32, %c0_i32_0, %c0_i32_1 : i32, i32, i32
  }
  func.func @transform_1(%arg0: i32, %arg1: i32) -> (i32, i32) {
    %c0_i32 = arith.constant 0 : i32
    %c0_i32_0 = arith.constant 0 : i32
    %c0_i32_1 = arith.constant 0 : i32
    return %c0_i32, %c0_i32_0 : i32, i32
  }
  func.func @transform_2(%arg0: i32, %arg1: i32) -> (i32, i32) {
    %c0_i32 = arith.constant 0 : i32
    %c0_i32_0 = arith.constant 0 : i32
    %c0_i32_1 = arith.constant 0 : i32
    return %c0_i32, %c0_i32_0 : i32, i32
  }
  func.func @transform_3(%arg0: i32, %arg1: i32) -> (i32, i32) {
    %c0_i32 = arith.constant 0 : i32
    %c0_i32_0 = arith.constant 0 : i32
    %c0_i32_1 = arith.constant 0 : i32
    return %c0_i32, %c0_i32_0 : i32, i32
  }
  func.func @transform_4(%arg0: i32, %arg1: i32) -> (i32, i32) {
    %c0_i32 = arith.constant 0 : i32
    %c0_i32_0 = arith.constant 0 : i32
    %c0_i32_1 = arith.constant 0 : i32
    return %c0_i32, %c0_i32_0 : i32, i32
  }
  func.func @transform_5(%arg0: i32, %arg1: i32) -> (i32, i32, i32, i32) {
    %c0_i32 = arith.constant 0 : i32
    %c0_i32_0 = arith.constant 0 : i32
    %c0_i32_1 = arith.constant 0 : i32
    return %arg0, %c0_i32, %c0_i32_0, %arg1 : i32, i32, i32, i32
  }
  func.func @transform_6(%arg0: i32, %arg1: i32) -> (i32, i32, i32) {
    %c0_i32 = arith.constant 0 : i32
    %c0_i32_0 = arith.constant 0 : i32
    return %arg0, %c0_i32, %arg1 : i32, i32, i32
  }
  func.func @transform_7(%arg0: i32, %arg1: i32) -> (i32, i32, i32) {
    %c0_i32 = arith.constant 0 : i32
    %c0_i32_0 = arith.constant 0 : i32
    return %arg0, %c0_i32, %arg1 : i32, i32, i32
  }
}

</mosaic_0001>

<llo_original>
// kernel: downsampler_block_forward.1
$region0: #{downsampler_block_forward.1}
  #allocation0 [shape = 'u32[]', space=smem, size = 0x4, offset = 0x4, fixed_abs, tag = 'smem constant byte address 0x4 - core index']
  #allocation1 [shape = 'u32[144,128]{1,0:T(1,128)}', space=vmem, size = 0x12000, scoped, tag = 'internal scratch']
  %s0 = inlined_call_operand.vmem [shape: bf16[9,4,4], index: 0, kind: input, shape index: {}]
  %s1 = inlined_call_operand.vmem [shape: f32[4,1], index: 1, kind: input, shape index: {}]
  %s2 = inlined_call_operand.vmem [shape: f32[4,1], index: 2, kind: input, shape index: {}]
  %s3 = inlined_call_operand.vmem [shape: f32[4,1], index: 3, kind: input, shape index: {}]
  %s4 = inlined_call_operand.vmem [shape: f32[4,1], index: 4, kind: input, shape index: {}]
  %s5 = inlined_call_operand.vmem [shape: bf16[2,9,4,64], index: 5, kind: input, shape index: {}]
  %s6 = inlined_call_operand.vmem [shape: f32[2,4,64], index: 6, kind: input, shape index: {}]
  %s7 = inlined_call_operand.vmem [shape: f32[2,8,64], index: 7, kind: output, shape index: {}]
  %s8 = sld [smem:[#allocation0]]
  $region61: #{downsampler_block_forward.1} parent=0
    _
  %s10 = ssub.s32 1, %s8
  %s11 = scalar_select 0, %s10, %s8
  loop: start=0, step=1, limit=4
  $region2: #{downsampler_block_forward.1} parent=0 // loop_pre_header
    _
  $region3: #{downsampler_block_forward.1} parent=0 // loop_header
    %s13 = sphi 0, %s17
    %p14 = scmp.ge.s32.totalorder %s13, 4
    %s20 = sphi 0, %s32
    %s21 = sphi 0, %s28
    %s22 = sphi 0, %s20
    %s23 = sphi 0, %s21
    %s24 = sphi 0, %s22
    %s25 = sphi 0, %s23
    %s33 = sphi 0, %s33
    %s35 = sphi 0, %s33
    %s36 = sphi 0, %s35
    %s50 = sphi 0, %s36
    %s54 = sphi 0, %s54
    %s56 = sphi 0, %s54
    %s57 = sphi 0, %s56
    %s71 = sphi 0, %s57
    %s75 = sphi 0, %s75
    %s77 = sphi 0, %s75
    %s78 = sphi 0, %s77
    %s92 = sphi 0, %s78
    %s96 = sphi 0, %s96
    %s98 = sphi 0, %s96
    %s99 = sphi 0, %s98
    %s113 = sphi 0, %s99
    %s117 = sphi 0, %s117
    %s119 = sphi 0, %s117
    %s120 = sphi 0, %s119
    %s134 = sphi 0, %s120
    %s142 = sphi 0, %s144
    %s145 = sphi 0, %s142
    %s146 = sphi 0, %s145
    %s162 = sphi 0, %s146
    %s170 = sphi 0, %s172
    %s173 = sphi 0, %s170
    %s174 = sphi 0, %s173
    %s190 = sphi 0, %s174
    %s198 = sphi 0, %s200
    %s201 = sphi 0, %s198
    %s202 = sphi 0, %s201
    %s218 = sphi 0, %s202
  $region4: #{downsampler_block_forward.1} parent=0 // loop_header_branch
    %16 = sbr.rel (%p14) target = $region8
  $region5: #{downsampler_block_forward.1} parent=0 // loop_body
    %s18 = ssub.s32 %s13, 1
    %s19 = ssub.s32 %s13, 2
    %s26 = sadd.s32 1, %s21
    %p27 = scmp.ge.s32.totalorder %s26, 1
    %s28 = scalar_select %p27, 0, %s26
    %s29 = sadd.s32 1, %s20
    %s30 = scalar_select %p27, %s29, %s20
    %p31 = scmp.ge.s32.totalorder %s30, 2
    %s32 = scalar_select %p31, 0, %s30
    %s34 = sadd.s32 %s33, 1
    %p37 = scmp.eq.s32.totalorder %s13, 1
    %p38 = scmp.ne.s32.totalorder %s33, %s35
    %p39 = scmp.eq.s32.totalorder %s13, 0
    %p40 = por %p38, %p39
    %p41 = scmp.ne.s32.totalorder %s33, %s35
    %p42 = scmp.eq.s32.totalorder %s18, 1
    %p43 = por %p41, %p42
    %p44 = scmp.ne.s32.totalorder %s35, %s36
    %p45 = scmp.eq.s32.totalorder %s18, 0
    %p46 = por %p44, %p45
    %p47 = scmp.ne.s32.totalorder %s35, %s36
    %p48 = scmp.eq.s32.totalorder %s19, 1
    %p49 = por %p47, %p48
    %p51 = scmp.ne.s32.totalorder %s36, %s50
    %p52 = scmp.eq.s32.totalorder %s19, 0
    %p53 = por %p51, %p52
    %s55 = sadd.s32 %s54, 1
    %p58 = scmp.eq.s32.totalorder %s13, 1
    %p59 = scmp.ne.s32.totalorder %s54, %s56
    %p60 = scmp.eq.s32.totalorder %s13, 0
    %p61 = por %p59, %p60
    %p62 = scmp.ne.s32.totalorder %s54, %s56
    %p63 = scmp.eq.s32.totalorder %s18, 1
    %p64 = por %p62, %p63
    %p65 = scmp.ne.s32.totalorder %s56, %s57
    %p66 = scmp.eq.s32.totalorder %s18, 0
    %p67 = por %p65, %p66
    %p68 = scmp.ne.s32.totalorder %s56, %s57
    %p69 = scmp.eq.s32.totalorder %s19, 1
    %p70 = por %p68, %p69
    %p72 = scmp.ne.s32.totalorder %s57, %s71
    %p73 = scmp.eq.s32.totalorder %s19, 0
    %p74 = por %p72, %p73
    %s76 = sadd.s32 %s75, 1
    %p79 = scmp.eq.s32.totalorder %s13, 1
    %p80 = scmp.ne.s32.totalorder %s75, %s77
    %p81 = scmp.eq.s32.totalorder %s13, 0
    %p82 = por %p80, %p81
    %p83 = scmp.ne.s32.totalorder %s75, %s77
    %p84 = scmp.eq.s32.totalorder %s18, 1
    %p85 = por %p83, %p84
    %p86 = scmp.ne.s32.totalorder %s77, %s78
    %p87 = scmp.eq.s32.totalorder %s18, 0
    %p88 = por %p86, %p87
    %p89 = scmp.ne.s32.totalorder %s77, %s78
    %p90 = scmp.eq.s32.totalorder %s19, 1
    %p91 = por %p89, %p90
    %p93 = scmp.ne.s32.totalorder %s78, %s92
    %p94 = scmp.eq.s32.totalorder %s19, 0
    %p95 = por %p93, %p94
    %s97 = sadd.s32 %s96, 1
    %p100 = scmp.eq.s32.totalorder %s13, 1
    %p101 = scmp.ne.s32.totalorder %s96, %s98
    %p102 = scmp.eq.s32.totalorder %s13, 0
    %p103 = por %p101, %p102
    %p104 = scmp.ne.s32.totalorder %s96, %s98
    %p105 = scmp.eq.s32.totalorder %s18, 1
    %p106 = por %p104, %p105
    %p107 = scmp.ne.s32.totalorder %s98, %s99
    %p108 = scmp.eq.s32.totalorder %s18, 0
    %p109 = por %p107, %p108
    %p110 = scmp.ne.s32.totalorder %s98, %s99
    %p111 = scmp.eq.s32.totalorder %s19, 1
    %p112 = por %p110, %p111
    %p114 = scmp.ne.s32.totalorder %s99, %s113
    %p115 = scmp.eq.s32.totalorder %s19, 0
    %p116 = por %p114, %p115
    %s118 = sadd.s32 %s117, 1
    %p121 = scmp.eq.s32.totalorder %s13, 1
    %p122 = scmp.ne.s32.totalorder %s117, %s119
    %p123 = scmp.eq.s32.totalorder %s13, 0
    %p124 = por %p122, %p123
    %p125 = scmp.ne.s32.totalorder %s117, %s119
    %p126 = scmp.eq.s32.totalorder %s18, 1
    %p127 = por %p125, %p126
    %p128 = scmp.ne.s32.totalorder %s119, %s120
    %p129 = scmp.eq.s32.totalorder %s18, 0
    %p130 = por %p128, %p129
    %p131 = scmp.ne.s32.totalorder %s119, %s120
    %p132 = scmp.eq.s32.totalorder %s19, 1
    %p133 = por %p131, %p132
    %p135 = scmp.ne.s32.totalorder %s120, %s134
    %p136 = scmp.eq.s32.totalorder %s19, 0
    %p137 = por %p135, %p136
    %s138 = ssub.s32 %s20, %s32
    %s139 = ssub.s32 %s21, %s28
    %s140 = sor.u32 %s138, %s139
    %p141 = scmp.eq.s32.totalorder %s140, 0
    %s143 = sadd.s32 %s142, 1
    %s144 = scalar_select %p141, %s142, %s143
    %p147 = pneg %p141
    %p148 = scmp.eq.s32.totalorder %s13, 1
    %p149 = por %p147, %p148
    %p150 = scmp.ne.s32.totalorder %s142, %s145
    %p151 = scmp.eq.s32.totalorder %s13, 0
    %p152 = por %p150, %p151
    %p153 = scmp.ne.s32.totalorder %s142, %s145
    %p154 = scmp.eq.s32.totalorder %s18, 1
    %p155 = por %p153, %p154
    %p156 = scmp.ne.s32.totalorder %s145, %s146
    %p157 = scmp.eq.s32.totalorder %s18, 0
    %p158 = por %p156, %p157
    %p159 = scmp.ne.s32.totalorder %s145, %s146
    %p160 = scmp.eq.s32.totalorder %s19, 1
    %p161 = por %p159, %p160
    %p163 = scmp.ne.s32.totalorder %s146, %s162
    %p164 = scmp.eq.s32.totalorder %s19, 0
    %p165 = por %p163, %p164
    %s166 = ssub.s32 %s20, %s32
    %s167 = ssub.s32 %s21, %s28
    %s168 = sor.u32 %s166, %s167
    %p169 = scmp.eq.s32.totalorder %s168, 0
    %s171 = sadd.s32 %s170, 1
    %s172 = scalar_select %p169, %s170, %s171
    %p175 = pneg %p169
    %p176 = scmp.eq.s32.totalorder %s13, 1
    %p177 = por %p175, %p176
    %p178 = scmp.ne.s32.totalorder %s170, %s173
    %p179 = scmp.eq.s32.totalorder %s13, 0
    %p180 = por %p178, %p179
    %p181 = scmp.ne.s32.totalorder %s170, %s173
    %p182 = scmp.eq.s32.totalorder %s18, 1
    %p183 = por %p181, %p182
    %p184 = scmp.ne.s32.totalorder %s173, %s174
    %p185 = scmp.eq.s32.totalorder %s18, 0
    %p186 = por %p184, %p185
    %p187 = scmp.ne.s32.totalorder %s173, %s174
    %p188 = scmp.eq.s32.totalorder %s19, 1
    %p189 = por %p187, %p188
    %p191 = scmp.ne.s32.totalorder %s174, %s190
    %p192 = scmp.eq.s32.totalorder %s19, 0
    %p193 = por %p191, %p192
    %s194 = ssub.s32 %s20, %s32
    %s195 = ssub.s32 %s21, %s28
    %s196 = sor.u32 %s194, %s195
    %p197 = scmp.eq.s32.totalorder %s196, 0
    %s199 = sadd.s32 %s198, 1
    %s200 = scalar_select %p197, %s198, %s199
    %p203 = pneg %p197
    %p204 = scmp.eq.s32.totalorder %s13, 1
    %p205 = por %p203, %p204
    %p206 = scmp.ne.s32.totalorder %s198, %s201
    %p207 = scmp.eq.s32.totalorder %s13, 0
    %p208 = por %p206, %p207
    %p209 = scmp.ne.s32.totalorder %s198, %s201
    %p210 = scmp.eq.s32.totalorder %s18, 1
    %p211 = por %p209, %p210
    %p212 = scmp.ne.s32.totalorder %s201, %s202
    %p213 = scmp.eq.s32.totalorder %s18, 0
    %p214 = por %p212, %p213
    %p215 = scmp.ne.s32.totalorder %s201, %s202
    %p216 = scmp.eq.s32.totalorder %s19, 1
    %p217 = por %p215, %p216
    %p219 = scmp.ne.s32.totalorder %s202, %s218
    %p220 = scmp.eq.s32.totalorder %s19, 0
    %p221 = por %p219, %p220
    %p222 = scmp.le.s32.totalorder 1, %s13
    %p223 = scmp.lt.s32.totalorder %s13, 3
    %p224 = pnand %p222, %p223
    %p225 = pneg %p224
    // Predicated region
    $region9: #{downsampler_block_forward.1} parent=5 // pred_check
      _
    $region10: #{downsampler_block_forward.1} parent=5 // pred_check_branch
      %227 = sbr.rel (%p224) target = $region12
    $region11: #{downsampler_block_forward.1} parent=5 // pred_region
      %s228 = ssub.s32 %s13, 1
      // Predicated region
      $region13: #{downsampler_block_forward.1} parent=11 // pred_check
        %p229 = pneg %p46
      $region14: #{downsampler_block_forward.1} parent=11 // pred_check_branch
        %231 = sbr.rel (%p229) target = $region16
      $region15: #{downsampler_block_forward.1} parent=11 // pred_region
        _
      $region16: #{downsampler_block_forward.1} parent=11 // pred_fallthru
        _
      // Predicated region
      $region17: #{downsampler_block_forward.1} parent=11 // pred_check
        %p232 = pneg %p67
      $region18: #{downsampler_block_forward.1} parent=11 // pred_check_branch
        %234 = sbr.rel (%p232) target = $region20
      $region19: #{downsampler_block_forward.1} parent=11 // pred_region
        _
      $region20: #{downsampler_block_forward.1} parent=11 // pred_fallthru
        _
      // Predicated region
      $region21: #{downsampler_block_forward.1} parent=11 // pred_check
        %p235 = pneg %p88
      $region22: #{downsampler_block_forward.1} parent=11 // pred_check_branch
        %237 = sbr.rel (%p235) target = $region24
      $region23: #{downsampler_block_forward.1} parent=11 // pred_region
        _
      $region24: #{downsampler_block_forward.1} parent=11 // pred_fallthru
        _
      // Predicated region
      $region25: #{downsampler_block_forward.1} parent=11 // pred_check
        %p238 = pneg %p109
      $region26: #{downsampler_block_forward.1} parent=11 // pred_check_branch
        %240 = sbr.rel (%p238) target = $region28
      $region27: #{downsampler_block_forward.1} parent=11 // pred_region
        _
      $region28: #{downsampler_block_forward.1} parent=11 // pred_fallthru
        _
      // Predicated region
      $region29: #{downsampler_block_forward.1} parent=11 // pred_check
        %p241 = pneg %p130
      $region30: #{downsampler_block_forward.1} parent=11 // pred_check_branch
        %243 = sbr.rel (%p241) target = $region32
      $region31: #{downsampler_block_forward.1} parent=11 // pred_region
        _
      $region32: #{downsampler_block_forward.1} parent=11 // pred_fallthru
        _
    $region12: #{downsampler_block_forward.1} parent=5 // pred_fallthru
      _
    %p244 = scmp.lt.s32.totalorder %s13, 2
    // Predicated region
    $region33: #{downsampler_block_forward.1} parent=5 // pred_check
      %p245 = pneg %p244
    $region34: #{downsampler_block_forward.1} parent=5 // pred_check_branch
      %247 = sbr.rel (%p245) target = $region36
    $region35: #{downsampler_block_forward.1} parent=5 // pred_region
      // Predicated region
      $region37: #{downsampler_block_forward.1} parent=35 // pred_check
        %p248 = pneg %p152
      $region38: #{downsampler_block_forward.1} parent=35 // pred_check_branch
        %250 = sbr.rel (%p248) target = $region40
      $region39: #{downsampler_block_forward.1} parent=35 // pred_region
        %p251 = scmp.lt.s32.totalorder %s20, 1
        %s252 = scalar_select %p251, %s20, 1
        %p253 = scmp.lt.s32.totalorder %s21, 0
        %s254 = scalar_select %p253, %s21, 0
        %s255 = smul.addr %s252, 9
        %s256 = sadd.s32 %s254, %s255
        %s257 = smul.addr %s256, 2
        %s258 = scalar_lea.vmem %s5, %s257
      $region40: #{downsampler_block_forward.1} parent=35 // pred_fallthru
        _
      // Predicated region
      $region41: #{downsampler_block_forward.1} parent=35 // pred_check
        %p259 = pneg %p180
      $region42: #{downsampler_block_forward.1} parent=35 // pred_check_branch
        %261 = sbr.rel (%p259) target = $region44
      $region43: #{downsampler_block_forward.1} parent=35 // pred_region
        %p262 = scmp.lt.s32.totalorder %s20, 1
        %s263 = scalar_select %p262, %s20, 1
        %p264 = scmp.lt.s32.totalorder %s21, 0
        %s265 = scalar_select %p264, %s21, 0
        %s266 = sadd.s32 %s265, %s263
        %s267 = smul.addr %s266, 4
        %s268 = scalar_lea.vmem %s6, %s267
      $region44: #{downsampler_block_forward.1} parent=35 // pred_fallthru
        _
    $region36: #{downsampler_block_forward.1} parent=5 // pred_fallthru
      _
    %p269 = scmp.le.s32.totalorder 1, %s13
    %p270 = scmp.lt.s32.totalorder %s13, 3
    %p271 = pnand %p269, %p270
    %p272 = pneg %p271
    // Predicated region
    $region45: #{downsampler_block_forward.1} parent=5 // pred_check
      _
    $region46: #{downsampler_block_forward.1} parent=5 // pred_check_branch
      %274 = sbr.rel (%p271) target = $region48
    $region47: #{downsampler_block_forward.1} parent=5 // pred_region
      %s275 = ssub.s32 %s13, 1
      %p276 = pneg %p46
      %p277 = pneg %p43
      %p278 = pneg %p67
      %p279 = pneg %p64
      %p280 = pneg %p88
      %p281 = pneg %p85
      %p282 = pneg %p109
      %p283 = pneg %p106
      %p284 = pneg %p130
      %p285 = pneg %p127
      %p286 = scmp.lt.s32.totalorder %s22, 1
      %s287 = scalar_select %p286, %s22, 1
      %p288 = scmp.lt.s32.totalorder %s23, 0
      %s289 = scalar_select %p288, %s23, 0
      %s290 = smul.addr %s287, 9
      %s291 = sadd.s32 %s289, %s290
      %s292 = smul.addr %s291, 2
      %s293 = scalar_lea.vmem %s5, %s292
      %p294 = pneg %p158
      %p295 = pneg %p155
      %p296 = scmp.lt.s32.totalorder %s22, 1
      %s297 = scalar_select %p296, %s22, 1
      %p298 = scmp.lt.s32.totalorder %s23, 0
      %s299 = scalar_select %p298, %s23, 0
      %s300 = sadd.s32 %s299, %s297
      %s301 = smul.addr %s300, 4
      %s302 = scalar_lea.vmem %s6, %s301
      %p303 = pneg %p186
      %p304 = pneg %p183
      %p305 = pneg %p214
      %p306 = pneg %p211
      %p307 = scmp.lt.s32.totalorder %s22, 1
      %s308 = scalar_select %p307, %s22, 1
      %p309 = scmp.lt.s32.totalorder %s23, 0
      %s310 = scalar_select %p309, %s23, 0
      %s311 = sadd.s32 %s310, %s308
      %s312 = smul.addr %s311, 8
      %s313 = scalar_lea.vmem %s7, %s312
      %p314 = scmp.lt.s32.totalorder %s22, 1
      %s315 = scalar_select %p314, %s22, 1
      %p316 = scmp.lt.s32.totalorder %s23, 0
      %s317 = scalar_select %p316, %s23, 0
      %s318 = smul.addr %s315, 9
      %s319 = sadd.s32 %s317, %s318
      %s320 = smul.addr %s319, 2
      %s321 = scalar_lea.vmem %s5, %s320
      %p322 = scmp.lt.s32.totalorder %s22, 1
      %s323 = scalar_select %p322, %s22, 1
      %p324 = scmp.lt.s32.totalorder %s23, 0
      %s325 = scalar_select %p324, %s23, 0
      %s326 = sadd.s32 %s325, %s323
      %s327 = smul.addr %s326, 4
      %s328 = scalar_lea.vmem %s6, %s327
      %p329 = scmp.lt.s32.totalorder %s22, 1
      %s330 = scalar_select %p329, %s22, 1
      %p331 = scmp.lt.s32.totalorder %s23, 0
      %s332 = scalar_select %p331, %s23, 0
      %s333 = sadd.s32 %s332, %s330
      %s334 = smul.addr %s333, 8
      %s335 = scalar_lea.vmem %s7, %s334
      %v337 = vld [vmem:[%s0] sm:$0x3]
      %v338 = vld [vmem:[%s321] sm:$0x3]
      %s339 = scalar_lea.vmem %s0, 2
      %v340 = vld [vmem:[%s339] sm:$0x3]
      %s341 = scalar_lea.vmem %s321, 2
      %v342 = vld [vmem:[%s341] sm:$0x3]
      %vm343 = vcmask 31744
      %v345 = vsel %vm343, %v340, 0
      %vm347 = vcmask 1041408
      %v349 = vsel %vm347, %v342, 0
      %351 = vmatprep.subr.bf16.mxu0 0
      %352 = vmatpush1.bf16.msra.mxu0 0
      %353 = vmatprep.subr.bf16.mxu0 0
      %354 = vmatpush1.bf16.msra.mxu0 0
      %355 = vmatprep.subr.bf16.mxu0 0
      %356 = vmatpush1.bf16.msra.mxu0 0
      %357 = vmatprep.subr.bf16.mxu0 0
      %358 = vmatpush1.bf16.msra.mxu0 0
      %359 = vmatprep.subr.bf16.mxu0 0
      %360 = vmatpush1.bf16.msra.mxu0 0
      %361 = vmatprep.subr.bf16.mxu0 0
      %362 = vmatpush1.bf16.msra.mxu0 0
      %363 = vmatprep.subr.bf16.mxu0 0
      %364 = vmatpush1.bf16.msra.mxu0 0
      %365 = vmatprep.subr.bf16.mxu0 0
      %366 = vmatpush1.bf16.msra.mxu0 %v349
      %367 = vmatprep.subr.bf16.mxu0 0
      %368 = vmatpush2.bf16.msra.mxu0 0
      %369 = vmatprep.subr.bf16.mxu0 0
      %370 = vmatpush2.bf16.msra.mxu0 0
      %371 = vmatprep.subr.bf16.mxu0 0
      %372 = vmatpush2.bf16.msra.mxu0 0
      %373 = vmatprep.subr.bf16.mxu0 0
      %374 = vmatpush2.bf16.msra.mxu0 0
      %375 = vmatprep.subr.bf16.mxu0 0
      %376 = vmatpush2.bf16.msra.mxu0 0
      %377 = vmatprep.subr.bf16.mxu0 0
      %378 = vmatpush2.bf16.msra.mxu0 0
      %379 = vmatprep.subr.bf16.mxu0 0
      %380 = vmatpush2.bf16.msra.mxu0 0
      %381 = vmatprep.subr.bf16.mxu0 0
      %382 = vmatpush2.bf16.msra.mxu0 0
      %383 = vmatprep.mubr.bf16.mxu0 0
      %384 = vmatmul.mubr.bf16.gmra.mxu0 %v345
      %v385 = vpop.f32.mrf.mxu0
      %v386 = vadd.f32 0.0, %v385
      %v387 = vpop.f32.mrf.mxu0
      %v388 = vpop.f32.mrf.mxu0
      %v389 = vpop.f32.mrf.mxu0
      %390 = vdwg.mxu0
      %v392 = vsel %vm343, %v337, 0
      %v395 = vsel %vm347, %v338, 0
      %397 = vmatprep.subr.bf16.mxu0 0
      %398 = vmatpush1.bf16.msra.mxu0 0
      %399 = vmatprep.subr.bf16.mxu0 0
      %400 = vmatpush1.bf16.msra.mxu0 0
      %401 = vmatprep.subr.bf16.mxu0 0
      %402 = vmatpush1.bf16.msra.mxu0 0
      %403 = vmatprep.subr.bf16.mxu0 0
      %404 = vmatpush1.bf16.msra.mxu0 0
      %405 = vmatprep.subr.bf16.mxu0 0
      %406 = vmatpush1.bf16.msra.mxu0 0
      %407 = vmatprep.subr.bf16.mxu0 0
      %408 = vmatpush1.bf16.msra.mxu0 0
      %409 = vmatprep.subr.bf16.mxu0 0
      %410 = vmatpush1.bf16.msra.mxu0 0
      %411 = vmatprep.subr.bf16.mxu0 0
      %412 = vmatpush1.bf16.msra.mxu0 %v395
      %413 = vmatprep.subr.bf16.mxu0 0
      %414 = vmatpush2.bf16.msra.mxu0 0
      %415 = vmatprep.subr.bf16.mxu0 0
      %416 = vmatpush2.bf16.msra.mxu0 0
      %417 = vmatprep.subr.bf16.mxu0 0
      %418 = vmatpush2.bf16.msra.mxu0 0
      %419 = vmatprep.subr.bf16.mxu0 0
      %420 = vmatpush2.bf16.msra.mxu0 0
      %421 = vmatprep.subr.bf16.mxu0 0
      %422 = vmatpush2.bf16.msra.mxu0 0
      %423 = vmatprep.subr.bf16.mxu0 0
      %424 = vmatpush2.bf16.msra.mxu0 0
      %425 = vmatprep.subr.bf16.mxu0 0
      %426 = vmatpush2.bf16.msra.mxu0 0
      %427 = vmatprep.subr.bf16.mxu0 0
      %428 = vmatpush2.bf16.msra.mxu0 0
      %429 = vmatprep.mubr.bf16.mxu0 0
      %430 = vmatmul.mubr.bf16.gmra.mxu0 %v392
      %v431 = vpop.f32.mrf.mxu0
      %v432 = vadd.f32 %v386, %v431
      %v433 = vpop.f32.mrf.mxu0
      %v434 = vpop.f32.mrf.mxu0
      %v435 = vpop.f32.mrf.mxu0
      %436 = vdwg.mxu0
      %s437 = scalar_lea.vmem %s0, 4
      %v438 = vld [vmem:[%s437] sm:$0x3]
      %s439 = scalar_lea.vmem %s321, 4
      %v440 = vld [vmem:[%s439] sm:$0x3]
      %v442 = vsel %vm343, %v438, 0
      %v445 = vsel %vm347, %v440, 0
      %447 = vmatprep.subr.bf16.mxu0 0
      %448 = vmatpush1.bf16.msra.mxu0 0
      %449 = vmatprep.subr.bf16.mxu0 0
      %450 = vmatpush1.bf16.msra.mxu0 0
      %451 = vmatprep.subr.bf16.mxu0 0
      %452 = vmatpush1.bf16.msra.mxu0 0
      %453 = vmatprep.subr.bf16.mxu0 0
      %454 = vmatpush1.bf16.msra.mxu0 0
      %455 = vmatprep.subr.bf16.mxu0 0
      %456 = vmatpush1.bf16.msra.mxu0 0
      %457 = vmatprep.subr.bf16.mxu0 0
      %458 = vmatpush1.bf16.msra.mxu0 0
      %459 = vmatprep.subr.bf16.mxu0 0
      %460 = vmatpush1.bf16.msra.mxu0 0
      %461 = vmatprep.subr.bf16.mxu0 0
      %462 = vmatpush1.bf16.msra.mxu0 %v445
      %463 = vmatprep.subr.bf16.mxu0 0
      %464 = vmatpush2.bf16.msra.mxu0 0
      %465 = vmatprep.subr.bf16.mxu0 0
      %466 = vmatpush2.bf16.msra.mxu0 0
      %467 = vmatprep.subr.bf16.mxu0 0
      %468 = vmatpush2.bf16.msra.mxu0 0
      %469 = vmatprep.subr.bf16.mxu0 0
      %470 = vmatpush2.bf16.msra.mxu0 0
      %471 = vmatprep.subr.bf16.mxu0 0
      %472 = vmatpush2.bf16.msra.mxu0 0
      %473 = vmatprep.subr.bf16.mxu0 0
      %474 = vmatpush2.bf16.msra.mxu0 0
      %475 = vmatprep.subr.bf16.mxu0 0
      %476 = vmatpush2.bf16.msra.mxu0 0
      %477 = vmatprep.subr.bf16.mxu0 0
      %478 = vmatpush2.bf16.msra.mxu0 0
      %479 = vmatprep.mubr.bf16.mxu0 0
      %480 = vmatmul.mubr.bf16.gmra.mxu0 %v442
      %v481 = vpop.f32.mrf.mxu0
      %v482 = vadd.f32 0.0, %v481
      %v483 = vpop.f32.mrf.mxu0
      %v484 = vpop.f32.mrf.mxu0
      %v485 = vpop.f32.mrf.mxu0
      %486 = vdwg.mxu0
      %v487 = vadd.f32 %v432, %v482
      %s488 = scalar_lea.vmem %s0, 6
      %v489 = vld [vmem:[%s488] sm:$0x3]
      %s490 = scalar_lea.vmem %s321, 6
      %v491 = vld [vmem:[%s490] sm:$0x3]
      %v493 = vsel %vm343, %v489, 0
      %v496 = vsel %vm347, %v491, 0
      %498 = vmatprep.subr.bf16.mxu0 0
      %499 = vmatpush1.bf16.msra.mxu0 0
      %500 = vmatprep.subr.bf16.mxu0 0
      %501 = vmatpush1.bf16.msra.mxu0 0
      %502 = vmatprep.subr.bf16.mxu0 0
      %503 = vmatpush1.bf16.msra.mxu0 0
      %504 = vmatprep.subr.bf16.mxu0 0
      %505 = vmatpush1.bf16.msra.mxu0 0
      %506 = vmatprep.subr.bf16.mxu0 0
      %507 = vmatpush1.bf16.msra.mxu0 0
      %508 = vmatprep.subr.bf16.mxu0 0
      %509 = vmatpush1.bf16.msra.mxu0 0
      %510 = vmatprep.subr.bf16.mxu0 0
      %511 = vmatpush1.bf16.msra.mxu0 0
      %512 = vmatprep.subr.bf16.mxu0 0
      %513 = vmatpush1.bf16.msra.mxu0 %v496
      %514 = vmatprep.subr.bf16.mxu0 0
      %515 = vmatpush2.bf16.msra.mxu0 0
      %516 = vmatprep.subr.bf16.mxu0 0
      %517 = vmatpush2.bf16.msra.mxu0 0
      %518 = vmatprep.subr.bf16.mxu0 0
      %519 = vmatpush2.bf16.msra.mxu0 0
      %520 = vmatprep.subr.bf16.mxu0 0
      %521 = vmatpush2.bf16.msra.mxu0 0
      %522 = vmatprep.subr.bf16.mxu0 0
      %523 = vmatpush2.bf16.msra.mxu0 0
      %524 = vmatprep.subr.bf16.mxu0 0
      %525 = vmatpush2.bf16.msra.mxu0 0
      %526 = vmatprep.subr.bf16.mxu0 0
      %527 = vmatpush2.bf16.msra.mxu0 0
      %528 = vmatprep.subr.bf16.mxu0 0
      %529 = vmatpush2.bf16.msra.mxu0 0
      %530 = vmatprep.mubr.bf16.mxu0 0
      %531 = vmatmul.mubr.bf16.gmra.mxu0 %v493
      %v532 = vpop.f32.mrf.mxu0
      %v533 = vadd.f32 0.0, %v532
      %v534 = vpop.f32.mrf.mxu0
      %v535 = vpop.f32.mrf.mxu0
      %v536 = vpop.f32.mrf.mxu0
      %537 = vdwg.mxu0
      %v538 = vadd.f32 %v487, %v533
      %s539 = scalar_lea.vmem %s0, 8
      %v540 = vld [vmem:[%s539] sm:$0x3]
      %s541 = scalar_lea.vmem %s321, 8
      %v542 = vld [vmem:[%s541] sm:$0x3]
      %v544 = vsel %vm343, %v540, 0
      %v547 = vsel %vm347, %v542, 0
      %549 = vmatprep.subr.bf16.mxu0 0
      %550 = vmatpush1.bf16.msra.mxu0 0
      %551 = vmatprep.subr.bf16.mxu0 0
      %552 = vmatpush1.bf16.msra.mxu0 0
      %553 = vmatprep.subr.bf16.mxu0 0
      %554 = vmatpush1.bf16.msra.mxu0 0
      %555 = vmatprep.subr.bf16.mxu0 0
      %556 = vmatpush1.bf16.msra.mxu0 0
      %557 = vmatprep.subr.bf16.mxu0 0
      %558 = vmatpush1.bf16.msra.mxu0 0
      %559 = vmatprep.subr.bf16.mxu0 0
      %560 = vmatpush1.bf16.msra.mxu0 0
      %561 = vmatprep.subr.bf16.mxu0 0
      %562 = vmatpush1.bf16.msra.mxu0 0
      %563 = vmatprep.subr.bf16.mxu0 0
      %564 = vmatpush1.bf16.msra.mxu0 %v547
      %565 = vmatprep.subr.bf16.mxu0 0
      %566 = vmatpush2.bf16.msra.mxu0 0
      %567 = vmatprep.subr.bf16.mxu0 0
      %568 = vmatpush2.bf16.msra.mxu0 0
      %569 = vmatprep.subr.bf16.mxu0 0
      %570 = vmatpush2.bf16.msra.mxu0 0
      %571 = vmatprep.subr.bf16.mxu0 0
      %572 = vmatpush2.bf16.msra.mxu0 0
      %573 = vmatprep.subr.bf16.mxu0 0
      %574 = vmatpush2.bf16.msra.mxu0 0
      %575 = vmatprep.subr.bf16.mxu0 0
      %576 = vmatpush2.bf16.msra.mxu0 0
      %577 = vmatprep.subr.bf16.mxu0 0
      %578 = vmatpush2.bf16.msra.mxu0 0
      %579 = vmatprep.subr.bf16.mxu0 0
      %580 = vmatpush2.bf16.msra.mxu0 0
      %581 = vmatprep.mubr.bf16.mxu0 0
      %582 = vmatmul.mubr.bf16.gmra.mxu0 %v544
      %v583 = vpop.f32.mrf.mxu0
      %v584 = vadd.f32 0.0, %v583
      %v585 = vpop.f32.mrf.mxu0
      %v586 = vpop.f32.mrf.mxu0
      %v587 = vpop.f32.mrf.mxu0
      %588 = vdwg.mxu0
      %v589 = vadd.f32 %v538, %v584
      %s590 = scalar_lea.vmem %s0, 10
      %v591 = vld [vmem:[%s590] sm:$0x3]
      %s592 = scalar_lea.vmem %s321, 10
      %v593 = vld [vmem:[%s592] sm:$0x3]
      %v595 = vsel %vm343, %v591, 0
      %v598 = vsel %vm347, %v593, 0
      %600 = vmatprep.subr.bf16.mxu0 0
      %601 = vmatpush1.bf16.msra.mxu0 0
      %602 = vmatprep.subr.bf16.mxu0 0
      %603 = vmatpush1.bf16.msra.mxu0 0
      %604 = vmatprep.subr.bf16.mxu0 0
      %605 = vmatpush1.bf16.msra.mxu0 0
      %606 = vmatprep.subr.bf16.mxu0 0
      %607 = vmatpush1.bf16.msra.mxu0 0
      %608 = vmatprep.subr.bf16.mxu0 0
      %609 = vmatpush1.bf16.msra.mxu0 0
      %610 = vmatprep.subr.bf16.mxu0 0
      %611 = vmatpush1.bf16.msra.mxu0 0
      %612 = vmatprep.subr.bf16.mxu0 0
      %613 = vmatpush1.bf16.msra.mxu0 0
      %614 = vmatprep.subr.bf16.mxu0 0
      %615 = vmatpush1.bf16.msra.mxu0 %v598
      %616 = vmatprep.subr.bf16.mxu0 0
      %617 = vmatpush2.bf16.msra.mxu0 0
      %618 = vmatprep.subr.bf16.mxu0 0
      %619 = vmatpush2.bf16.msra.mxu0 0
      %620 = vmatprep.subr.bf16.mxu0 0
      %621 = vmatpush2.bf16.msra.mxu0 0
      %622 = vmatprep.subr.bf16.mxu0 0
      %623 = vmatpush2.bf16.msra.mxu0 0
      %624 = vmatprep.subr.bf16.mxu0 0
      %625 = vmatpush2.bf16.msra.mxu0 0
      %626 = vmatprep.subr.bf16.mxu0 0
      %627 = vmatpush2.bf16.msra.mxu0 0
      %628 = vmatprep.subr.bf16.mxu0 0
      %629 = vmatpush2.bf16.msra.mxu0 0
      %630 = vmatprep.subr.bf16.mxu0 0
      %631 = vmatpush2.bf16.msra.mxu0 0
      %632 = vmatprep.mubr.bf16.mxu0 0
      %633 = vmatmul.mubr.bf16.gmra.mxu0 %v595
      %v634 = vpop.f32.mrf.mxu0
      %v635 = vadd.f32 0.0, %v634
      %v636 = vpop.f32.mrf.mxu0
      %v637 = vpop.f32.mrf.mxu0
      %v638 = vpop.f32.mrf.mxu0
      %639 = vdwg.mxu0
      %v640 = vadd.f32 %v589, %v635
      %s641 = scalar_lea.vmem %s0, 12
      %v642 = vld [vmem:[%s641] sm:$0x3]
      %s643 = scalar_lea.vmem %s321, 12
      %v644 = vld [vmem:[%s643] sm:$0x3]
      %v646 = vsel %vm343, %v642, 0
      %v649 = vsel %vm347, %v644, 0
      %651 = vmatprep.subr.bf16.mxu0 0
      %652 = vmatpush1.bf16.msra.mxu0 0
      %653 = vmatprep.subr.bf16.mxu0 0
      %654 = vmatpush1.bf16.msra.mxu0 0
      %655 = vmatprep.subr.bf16.mxu0 0
      %656 = vmatpush1.bf16.msra.mxu0 0
      %657 = vmatprep.subr.bf16.mxu0 0
      %658 = vmatpush1.bf16.msra.mxu0 0
      %659 = vmatprep.subr.bf16.mxu0 0
      %660 = vmatpush1.bf16.msra.mxu0 0
      %661 = vmatprep.subr.bf16.mxu0 0
      %662 = vmatpush1.bf16.msra.mxu0 0
      %663 = vmatprep.subr.bf16.mxu0 0
      %664 = vmatpush1.bf16.msra.mxu0 0
      %665 = vmatprep.subr.bf16.mxu0 0
      %666 = vmatpush1.bf16.msra.mxu0 %v649
      %667 = vmatprep.subr.bf16.mxu0 0
      %668 = vmatpush2.bf16.msra.mxu0 0
      %669 = vmatprep.subr.bf16.mxu0 0
      %670 = vmatpush2.bf16.msra.mxu0 0
      %671 = vmatprep.subr.bf16.mxu0 0
      %672 = vmatpush2.bf16.msra.mxu0 0
      %673 = vmatprep.subr.bf16.mxu0 0
      %674 = vmatpush2.bf16.msra.mxu0 0
      %675 = vmatprep.subr.bf16.mxu0 0
      %676 = vmatpush2.bf16.msra.mxu0 0
      %677 = vmatprep.subr.bf16.mxu0 0
      %678 = vmatpush2.bf16.msra.mxu0 0
      %679 = vmatprep.subr.bf16.mxu0 0
      %680 = vmatpush2.bf16.msra.mxu0 0
      %681 = vmatprep.subr.bf16.mxu0 0
      %682 = vmatpush2.bf16.msra.mxu0 0
      %683 = vmatprep.mubr.bf16.mxu0 0
      %684 = vmatmul.mubr.bf16.gmra.mxu0 %v646
      %v685 = vpop.f32.mrf.mxu0
      %v686 = vadd.f32 0.0, %v685
      %v687 = vpop.f32.mrf.mxu0
      %v688 = vpop.f32.mrf.mxu0
      %v689 = vpop.f32.mrf.mxu0
      %690 = vdwg.mxu0
      %v691 = vadd.f32 %v640, %v686
      %s692 = scalar_lea.vmem %s0, 14
      %v693 = vld [vmem:[%s692] sm:$0x3]
      %s694 = scalar_lea.vmem %s321, 14
      %v695 = vld [vmem:[%s694] sm:$0x3]
      %v697 = vsel %vm343, %v693, 0
      %v700 = vsel %vm347, %v695, 0
      %702 = vmatprep.subr.bf16.mxu0 0
      %703 = vmatpush1.bf16.msra.mxu0 0
      %704 = vmatprep.subr.bf16.mxu0 0
      %705 = vmatpush1.bf16.msra.mxu0 0
      %706 = vmatprep.subr.bf16.mxu0 0
      %707 = vmatpush1.bf16.msra.mxu0 0
      %708 = vmatprep.subr.bf16.mxu0 0
      %709 = vmatpush1.bf16.msra.mxu0 0
      %710 = vmatprep.subr.bf16.mxu0 0
      %711 = vmatpush1.bf16.msra.mxu0 0
      %712 = vmatprep.subr.bf16.mxu0 0
      %713 = vmatpush1.bf16.msra.mxu0 0
      %714 = vmatprep.subr.bf16.mxu0 0
      %715 = vmatpush1.bf16.msra.mxu0 0
      %716 = vmatprep.subr.bf16.mxu0 0
      %717 = vmatpush1.bf16.msra.mxu0 %v700
      %718 = vmatprep.subr.bf16.mxu0 0
      %719 = vmatpush2.bf16.msra.mxu0 0
      %720 = vmatprep.subr.bf16.mxu0 0
      %721 = vmatpush2.bf16.msra.mxu0 0
      %722 = vmatprep.subr.bf16.mxu0 0
      %723 = vmatpush2.bf16.msra.mxu0 0
      %724 = vmatprep.subr.bf16.mxu0 0
      %725 = vmatpush2.bf16.msra.mxu0 0
      %726 = vmatprep.subr.bf16.mxu0 0
      %727 = vmatpush2.bf16.msra.mxu0 0
      %728 = vmatprep.subr.bf16.mxu0 0
      %729 = vmatpush2.bf16.msra.mxu0 0
      %730 = vmatprep.subr.bf16.mxu0 0
      %731 = vmatpush2.bf16.msra.mxu0 0
      %732 = vmatprep.subr.bf16.mxu0 0
      %733 = vmatpush2.bf16.msra.mxu0 0
      %734 = vmatprep.mubr.bf16.mxu0 0
      %735 = vmatmul.mubr.bf16.gmra.mxu0 %v697
      %v736 = vpop.f32.mrf.mxu0
      %v737 = vadd.f32 0.0, %v736
      %v738 = vpop.f32.mrf.mxu0
      %v739 = vpop.f32.mrf.mxu0
      %v740 = vpop.f32.mrf.mxu0
      %741 = vdwg.mxu0
      %v742 = vadd.f32 %v691, %v737
      %s743 = scalar_lea.vmem %s0, 16
      %v744 = vld [vmem:[%s743] sm:$0x3]
      %s745 = scalar_lea.vmem %s321, 16
      %v746 = vld [vmem:[%s745] sm:$0x3]
      %v748 = vsel %vm343, %v744, 0
      %v751 = vsel %vm347, %v746, 0
      %753 = vmatprep.subr.bf16.mxu0 0
      %754 = vmatpush1.bf16.msra.mxu0 0
      %755 = vmatprep.subr.bf16.mxu0 0
      %756 = vmatpush1.bf16.msra.mxu0 0
      %757 = vmatprep.subr.bf16.mxu0 0
      %758 = vmatpush1.bf16.msra.mxu0 0
      %759 = vmatprep.subr.bf16.mxu0 0
      %760 = vmatpush1.bf16.msra.mxu0 0
      %761 = vmatprep.subr.bf16.mxu0 0
      %762 = vmatpush1.bf16.msra.mxu0 0
      %763 = vmatprep.subr.bf16.mxu0 0
      %764 = vmatpush1.bf16.msra.mxu0 0
      %765 = vmatprep.subr.bf16.mxu0 0
      %766 = vmatpush1.bf16.msra.mxu0 0
      %767 = vmatprep.subr.bf16.mxu0 0
      %768 = vmatpush1.bf16.msra.mxu0 %v751
      %769 = vmatprep.subr.bf16.mxu0 0
      %770 = vmatpush2.bf16.msra.mxu0 0
      %771 = vmatprep.subr.bf16.mxu0 0
      %772 = vmatpush2.bf16.msra.mxu0 0
      %773 = vmatprep.subr.bf16.mxu0 0
      %774 = vmatpush2.bf16.msra.mxu0 0
      %775 = vmatprep.subr.bf16.mxu0 0
      %776 = vmatpush2.bf16.msra.mxu0 0
      %777 = vmatprep.subr.bf16.mxu0 0
      %778 = vmatpush2.bf16.msra.mxu0 0
      %779 = vmatprep.subr.bf16.mxu0 0
      %780 = vmatpush2.bf16.msra.mxu0 0
      %781 = vmatprep.subr.bf16.mxu0 0
      %782 = vmatpush2.bf16.msra.mxu0 0
      %783 = vmatprep.subr.bf16.mxu0 0
      %784 = vmatpush2.bf16.msra.mxu0 0
      %785 = vmatprep.mubr.bf16.mxu0 0
      %786 = vmatmul.mubr.bf16.gmra.mxu0 %v748
      %v787 = vpop.f32.mrf.mxu0
      %v788 = vadd.f32 0.0, %v787
      %v789 = vpop.f32.mrf.mxu0
      %v790 = vpop.f32.mrf.mxu0
      %v791 = vpop.f32.mrf.mxu0
      %792 = vdwg.mxu0
      %v793 = vadd.f32 %v742, %v788
      %v794 = vld [vmem:[%s1] sm:$0xf]
      %796 = vset.pattern.permute.xlu0 0
      %797 = vperm.xlu0 %796, %v794
      %v798 = vpop.permute.xlu0 %797
      %v800 = vmul.f32 %v793, %v798
      %v801 = vld [vmem:[%s2] sm:$0xf]
      %803 = vset.pattern.permute.xlu0 0
      %804 = vperm.xlu0 %803, %v801
      %v805 = vpop.permute.xlu0 %804
      %v807 = vadd.f32 %v800, %v805
      %v808 = vmax.f32 %v807, 0.0
      %v809 = vld [vmem:[%s328] sm:$0xf]
      %v810 = vld [vmem:[%s3] sm:$0xf]
      %812 = vset.pattern.permute.xlu0 0
      %813 = vperm.xlu0 %812, %v810
      %v814 = vpop.permute.xlu0 %813
      %v816 = vmul.f32 %v809, %v814
      %v817 = vld [vmem:[%s4] sm:$0xf]
      %819 = vset.pattern.permute.xlu0 0
      %820 = vperm.xlu0 %819, %v817
      %v821 = vpop.permute.xlu0 %820
      %v823 = vadd.f32 %v816, %v821
      %v824 = vmax.f32 %v823, 0.0
      %v826 = vrot.slane %v824, 4
      %vm828 = vcmask 1043456
      %v829 = vsel %vm828, %v808, %v826
      %vm830 = vcmask 523264
      %831 = vst.msk [vmem:[%s335] sm:$0xff] %vm830, %v829
      %p832 = scmp.lt.s32.totalorder %s22, 1
      %s833 = scalar_select %p832, %s22, 1
      %p834 = scmp.lt.s32.totalorder %s23, 0
      %s835 = scalar_select %p834, %s23, 0
      %s836 = sadd.s32 %s835, %s833
      %s837 = smul.addr %s836, 8
      %s838 = scalar_lea.vmem %s7, %s837
      // Predicated region
      $region49: #{downsampler_block_forward.1} parent=47 // pred_check
        %p839 = pneg %p211
      $region50: #{downsampler_block_forward.1} parent=47 // pred_check_branch
        %841 = sbr.rel (%p839) target = $region52
      $region51: #{downsampler_block_forward.1} parent=47 // pred_region
        _
      $region52: #{downsampler_block_forward.1} parent=47 // pred_fallthru
        _
    $region48: #{downsampler_block_forward.1} parent=5 // pred_fallthru
      _
    %p842 = scmp.le.s32.totalorder 2, %s13
    // Predicated region
    $region53: #{downsampler_block_forward.1} parent=5 // pred_check
      %p843 = pneg %p842
    $region54: #{downsampler_block_forward.1} parent=5 // pred_check_branch
      %845 = sbr.rel (%p843) target = $region56
    $region55: #{downsampler_block_forward.1} parent=5 // pred_region
      %s846 = ssub.s32 %s13, 2
      // Predicated region
      $region57: #{downsampler_block_forward.1} parent=55 // pred_check
        %p847 = pneg %p217
      $region58: #{downsampler_block_forward.1} parent=55 // pred_check_branch
        %849 = sbr.rel (%p847) target = $region60
      $region59: #{downsampler_block_forward.1} parent=55 // pred_region
        %p850 = scmp.lt.s32.totalorder %s24, 1
        %s851 = scalar_select %p850, %s24, 1
        %p852 = scmp.lt.s32.totalorder %s25, 0
        %s853 = scalar_select %p852, %s25, 0
        %s854 = sadd.s32 %s853, %s851
        %s855 = smul.addr %s854, 8
        %s856 = scalar_lea.vmem %s7, %s855
      $region60: #{downsampler_block_forward.1} parent=55 // pred_fallthru
        _
    $region56: #{downsampler_block_forward.1} parent=5 // pred_fallthru
      _
  $region6: #{downsampler_block_forward.1} parent=0 // loop_footer
    %s17 = sadd.s32 1, %s13
  $region7: #{downsampler_block_forward.1} parent=0 // loop_footer_branch
    %12 = sbr.rel target = $region3
  $region8: #{downsampler_block_forward.1} parent=0 // loop_exit
    _

</llo_original>
